<compile_context>
chip_gen: v5e
topology: v5e:2x2
jax: 0.10.0
libtpu: 0.0.40
codegen_flags: <defaults>
</compile_context>

<pallas_src>
import numpy as np
import jax
import jax.numpy as jnp
from jax.experimental import pallas as pl
from jax.experimental.pallas import tpu as pltpu


# ----------------------------------------------------------------------------
# Kernels
# ----------------------------------------------------------------------------
def _tail_layers(h, w2_ref, b2_ref, w3_ref, b3_ref, w4_ref, b4_ref, cdt):
    """Layers 2-4 (block-diagonal fused twin heads).  `h` is the f32 layer-1 pre-act."""
    h = jnp.maximum(h, 0.0).astype(cdt)        # ReLU; eval-mode dropout = identity
    h = jnp.dot(h, w2_ref[...], preferred_element_type=jnp.float32) + b2_ref[...]
    h = jnp.maximum(h, 0.0).astype(cdt)
    h = jnp.dot(h, w3_ref[...], preferred_element_type=jnp.float32) + b3_ref[...]
    h = jnp.maximum(h, 0.0).astype(cdt)
    # Layer 4: fused [2H, 2] head -> [tb, 2] (column 0 = q1, column 1 = q2)
    return jnp.dot(h, w4_ref[...], preferred_element_type=jnp.float32) + b4_ref[...]


def _critic_kernel_split_sa(gs_ref, ja_ref,
                            w1g_ref, w1a_ref, b1_ref,
                            w2_ref, b2_ref, w3_ref, b3_ref, w4_ref, b4_ref,
                            q_ref):
    """Twin-Q forward on one batch tile with separate global_state / joint_action inputs.

    Layer 1 is computed as gs @ W1_gs + ja @ W1_ja (no concat, no HBM round trip).
    """
    cdt = w1g_ref.dtype  # weight/activation storage dtype (bf16 production default)
    h = (jnp.dot(gs_ref[...].astype(cdt), w1g_ref[...],
                 preferred_element_type=jnp.float32)
         + jnp.dot(ja_ref[...].astype(cdt), w1a_ref[...],
                   preferred_element_type=jnp.float32)
         + b1_ref[...])
    q = _tail_layers(h, w2_ref, b2_ref, w3_ref, b3_ref, w4_ref, b4_ref, cdt)
    q_ref[...] = q.astype(q_ref.dtype)


def _critic_kernel_fused_sa(sa_ref,
                            w1_ref, b1_ref,
                            w2_ref, b2_ref, w3_ref, b3_ref, w4_ref, b4_ref,
                            q_ref):
    """Twin-Q forward when the caller supplies a pre-fused [tb, D_gs+D_ja] tensor."""
    cdt = w1_ref.dtype
    h = (jnp.dot(sa_ref[...].astype(cdt), w1_ref[...],
                 preferred_element_type=jnp.float32)
         + b1_ref[...])
    q = _tail_layers(h, w2_ref, b2_ref, w3_ref, b3_ref, w4_ref, b4_ref, cdt)
    q_ref[...] = q.astype(q_ref.dtype)


# ----------------------------------------------------------------------------
# Tile / VMEM planning
# ----------------------------------------------------------------------------
def _round_up(x, m):
    return ((x + m - 1) // m) * m


def _vmem_plan(B, n_stream_inputs, in_itemsize, out_itemsize, weight_bytes,
               max_tile_b, tile_vmem_budget_bytes, min_grid_steps):
    """Pick the batch tile from an explicit VMEM budget and derive vmem_limit_bytes.

    Every streamed block [tb, feat] is lane-padded to 128 in VMEM and double-buffered.
    """
    per_row = n_stream_inputs * 2 * 128 * in_itemsize   # input blocks, double-buffered
    per_row += 2 * 128 * out_itemsize                    # output block, double-buffered
    per_row += 4 * 128 * 4                               # f32 activations / temporaries

    budget_tb = max(8, ((tile_vmem_budget_bytes // per_row) // 8) * 8)
    tb = min(B, max_tile_b, budget_tb)

    # Keep >= min_grid_steps grid steps at larger batches so v7x's second TensorCore
    # gets work under dimension_semantics=("parallel",).  Costs ~0.35 us/extra step
    # on single-TC chips — negligible.
    if min_grid_steps > 1 and B >= 8 * min_grid_steps:
        tb = min(tb, _round_up(pl.cdiv(B, min_grid_steps), 8))

    if B >= 8:
        tb = max(8, (tb // 8) * 8)   # sublane multiple
    tb = max(1, tb)

    needed = tb * per_row + 2 * weight_bytes + (2 << 20)
    # Raise the scoped-VMEM limit (16/32 MiB defaults) but stay under v7x's 64 MiB.
    vmem_limit = int(min(max(needed, 32 << 20), 48 << 20))
    return tb, vmem_limit


# ----------------------------------------------------------------------------
# Wrapper
# ----------------------------------------------------------------------------
def centralized_critic_forward(global_state, joint_action, params, *,
                               out_dtype=jnp.float32,
                               max_tile_b=4096,
                               tile_vmem_budget_bytes=24 * 1024 * 1024,
                               min_grid_steps=2):
    """Fused twin-Q critic forward.

    If `joint_action is None`, `global_state` is treated as a pre-fused
    [B, D_gs + D_ja] state-action tensor (single layer-1 matmul path).

    Returns the fused q array of shape [B, 2] in `out_dtype`
    (column 0 = q1, column 1 = q2).  Use `split_q` for the (q1, q2) PyTorch signature.
    """
    fused_sa = joint_action is None
    B = global_state.shape[0]

    if fused_sa:
        stream_inputs = (global_state,)
        weights = (params["w1"], params["b1"],
                   params["w2"], params["b2"],
                   params["w3"], params["b3"],
                   params["w4"], params["b4"])
        kernel = _critic_kernel_fused_sa
    else:
        stream_inputs = (global_state, joint_action)
        weights = (params["w1_gs"], params["w1_ja"], params["b1"],
                   params["w2"], params["b2"],
                   params["w3"], params["b3"],
                   params["w4"], params["b4"])
        kernel = _critic_kernel_split_sa

    in_itemsize = max(np.dtype(x.dtype).itemsize for x in stream_inputs)
    out_itemsize = np.dtype(out_dtype).itemsize
    weight_bytes = sum(int(np.prod(w.shape)) * np.dtype(w.dtype).itemsize
                       for w in weights)

    tb, vmem_limit = _vmem_plan(B, len(stream_inputs), in_itemsize, out_itemsize,
                                weight_bytes, max_tile_b, tile_vmem_budget_bytes,
                                min_grid_steps)
    grid = (pl.cdiv(B, tb),)

    def stream_spec(x):
        feat = x.shape[1]
        return pl.BlockSpec((tb, feat), lambda i: (i, 0))

    def resident_spec(w):
        # Constant block index -> weight stays VMEM-resident across grid steps.
        return pl.BlockSpec(w.shape, lambda i: (0,) * w.ndim)

    in_specs = ([stream_spec(x) for x in stream_inputs]
                + [resident_spec(w) for w in weights])

    q = pl.pallas_call(
        kernel,
        out_shape=jax.ShapeDtypeStruct((B, 2), out_dtype),
        grid=grid,
        in_specs=in_specs,
        out_specs=pl.BlockSpec((tb, 2), lambda i: (i, 0)),
        compiler_params=pltpu.CompilerParams(
            dimension_semantics=("parallel",),
            vmem_limit_bytes=vmem_limit),
    )(*stream_inputs, *weights)
    return q


def split_q(q):
    """Convenience: fused [B, 2] -> (q1 [B,1], q2 [B,1]) to match the PyTorch module."""
    return q[:, 0:1], q[:, 1:2]


# ----------------------------------------------------------------------------
# Parameter construction
# ----------------------------------------------------------------------------
def _xavier_uniform(key, fan_in, fan_out):
    # Matches torch.nn.init.xavier_uniform_ bound; stored as [in, out].
    bound = np.sqrt(6.0 / (fan_in + fan_out))
    return jax.random.uniform(key, (fan_in, fan_out),
                              minval=-bound, maxval=bound, dtype=jnp.float32)


def init_raw_params(key, global_state_dim, joint_action_dim, hidden_dim):
    """Per-head (unfused) parameters, mirroring the PyTorch module layout.

    w* : [2, in, out] (head 0 = q1, head 1 = q2), b* : [2, out] (zeros).
    """
    D = global_state_dim + joint_action_dim
    H = hidden_dim
    keys = jax.random.split(key, 8)

    def stack(k0, k1, fi, fo):
        return jnp.stack([_xavier_uniform(k0, fi, fo), _xavier_uniform(k1, fi, fo)])

    w1 = stack(keys[0], keys[4], D, H)
    w2 = stack(keys[1], keys[5], H, H)
    w3 = stack(keys[2], keys[6], H, H)
    w4 = stack(keys[3], keys[7], H, 1)
    b1 = jnp.zeros((2, H), jnp.float32)
    b2 = jnp.zeros((2, H), jnp.float32)
    b3 = jnp.zeros((2, H), jnp.float32)
    b4 = jnp.zeros((2, 1), jnp.float32)
    return (w1, b1, w2, b2, w3, b3, w4, b4)


def pack_params(raw, global_state_dim, param_dtype=jnp.bfloat16):
    """Fuse the two heads into the kernel's packed layout.

    Returns a dict with:
      w1    [D, 2H]      (for the pre-fused state-action path)
      w1_gs [D_gs, 2H], w1_ja [D_ja, 2H]   (layer 1 split over the concat axis)
      w2,w3 [2H, 2H] block-diagonal, w4 [2H, 2] block-diagonal,
      biases f32 shaped [1, out].  Weights cast to `param_dtype` (bf16 default).
    """
    (w1_h, b1_h, w2_h, b2_h, w3_h, b3_h, w4_h, b4_h) = raw
    H = w1_h.shape[2]
    H2 = 2 * H

    w1f = jnp.concatenate([w1_h[0], w1_h[1]], axis=1)          # [D, 2H]

    def blockdiag(w):                                          # [2, H, H] -> [2H, 2H]
        z = jnp.zeros((H, H), w.dtype)
        top = jnp.concatenate([w[0], z], axis=1)
        bot = jnp.concatenate([z, w[1]], axis=1)
        return jnp.concatenate([top, bot], axis=0)

    w2f = blockdiag(w2_h)
    w3f = blockdiag(w3_h)

    zcol = jnp.zeros((H, 1), w4_h.dtype)
    w4f = jnp.concatenate(
        [jnp.concatenate([w4_h[0], zcol], axis=1),
         jnp.concatenate([zcol, w4_h[1]], axis=1)], axis=0)    # [2H, 2]

    cast = lambda w: w.astype(param_dtype)
    return {
        "w1": cast(w1f),
        "w1_gs": cast(w1f[:global_state_dim]),
        "w1_ja": cast(w1f[global_state_dim:]),
        "b1": jnp.concatenate([b1_h[0], b1_h[1]]).reshape(1, H2).astype(jnp.float32),
        "w2": cast(w2f),
        "b2": jnp.concatenate([b2_h[0], b2_h[1]]).reshape(1, H2).astype(jnp.float32),
        "w3": cast(w3f),
        "b3": jnp.concatenate([b3_h[0], b3_h[1]]).reshape(1, H2).astype(jnp.float32),
        "w4": cast(w4f),
        "b4": jnp.concatenate([b4_h[0], b4_h[1]]).reshape(1, 2).astype(jnp.float32),
    }


# ----------------------------------------------------------------------------
# Pure-JAX reference (per-head, unfused) for correctness checks
# ----------------------------------------------------------------------------
def _reference_forward(global_state, joint_action, raw, compute_dtype=jnp.float32):
    """Mirrors the kernel's casting chain so bf16 comparisons are apples-to-apples."""
    (w1, b1, w2, b2, w3, b3, w4, b4) = raw
    sa = jnp.concatenate([global_state.astype(jnp.float32),
                          joint_action.astype(jnp.float32)], axis=1)

    def head(i):
        x = sa.astype(compute_dtype)
        h = jnp.dot(x, w1[i].astype(compute_dtype),
                    preferred_element_type=jnp.float32) + b1[i]
        h = jnp.maximum(h, 0.0).astype(compute_dtype)
        h = jnp.dot(h, w2[i].astype(compute_dtype),
                    preferred_element_type=jnp.float32) + b2[i]
        h = jnp.maximum(h, 0.0).astype(compute_dtype)
        h = jnp.dot(h, w3[i].astype(compute_dtype),
                    preferred_element_type=jnp.float32) + b3[i]
        h = jnp.maximum(h, 0.0).astype(compute_dtype)
        return jnp.dot(h, w4[i].astype(compute_dtype),
                       preferred_element_type=jnp.float32) + b4[i]

    return head(0), head(1)


def _check(q_col, ref, rtol, atol):
    np.testing.assert_allclose(np.asarray(q_col).astype(np.float32),
                               np.asarray(ref).astype(np.float32),
                               rtol=rtol, atol=atol)


# ----------------------------------------------------------------------------
# Demo / self-test
# ----------------------------------------------------------------------------
if __name__ == "__main__":
    batch = 8
    global_state_dim = 24
    joint_action_dim = 8
    hidden_dim = 32

    key = jax.random.PRNGKey(0)
    k_gs, k_ja, k_p, k_gs2, k_ja2 = jax.random.split(key, 5)

    gs = jax.random.normal(k_gs, (batch, global_state_dim), dtype=jnp.float32)
    ja = jax.random.normal(k_ja, (batch, joint_action_dim), dtype=jnp.float32)
    raw = init_raw_params(k_p, global_state_dim, joint_action_dim, hidden_dim)

    # ---- 1) Production default: bf16 weights, f32 inputs, f32 [B,2] output ----
    params_bf16 = pack_params(raw, global_state_dim)            # bf16 default
    q = jax.block_until_ready(centralized_critic_forward(gs, ja, params_bf16))
    r1b, r2b = _reference_forward(gs, ja, raw, jnp.bfloat16)
    _check(q[:, 0:1], r1b, 2e-2, 2e-2)
    _check(q[:, 1:2], r2b, 2e-2, 2e-2)
    q1, q2 = split_q(q)
    assert q1.shape == (batch, 1) and q2.shape == (batch, 1)

    # ---- 2) f32 weights (strict tolerance) ----
    params_f32 = pack_params(raw, global_state_dim, param_dtype=jnp.float32)
    q32 = jax.block_until_ready(centralized_critic_forward(gs, ja, params_f32))
    r1, r2 = _reference_forward(gs, ja, raw, jnp.float32)
    _check(q32[:, 0:1], r1, 1e-5, 1e-5)
    _check(q32[:, 1:2], r2, 1e-5, 1e-5)

    # ---- 3) bf16 inputs + bf16 output (v5e HBM-traffic saver), bf16 weights ----
    q_bf = jax.block_until_ready(
        centralized_critic_forward(gs.astype(jnp.bfloat16), ja.astype(jnp.bfloat16),
                                   params_bf16, out_dtype=jnp.bfloat16))
    _check(q_bf[:, 0:1], r1b, 3e-2, 3e-2)
    _check(q_bf[:, 1:2], r2b, 3e-2, 3e-2)

    # ---- 4) Batch not a multiple of the tile (partial final grid step) ----
    B2 = 13
    gs13 = jax.random.normal(k_gs2, (B2, global_state_dim), dtype=jnp.float32)
    ja13 = jax.random.normal(k_ja2, (B2, joint_action_dim), dtype=jnp.float32)
    q13 = jax.block_until_ready(
        centralized_critic_forward(gs13, ja13, params_f32, max_tile_b=8))
    r1p, r2p = _reference_forward(gs13, ja13, raw, jnp.float32)
    _check(q13[:, 0:1], r1p, 1e-5, 1e-5)
    _check(q13[:, 1:2], r2p, 1e-5, 1e-5)

    # ---- 5) Pre-fused state-action input path (upstream emits [B, D_gs+D_ja]) ----
    sa = jnp.concatenate([gs, ja], axis=1)   # produced by the (simulated) upstream, not the wrapper
    q_sa = jax.block_until_ready(centralized_critic_forward(sa, None, params_f32))
    _check(q_sa[:, 0:1], r1, 1e-5, 1e-5)
    _check(q_sa[:, 1:2], r2, 1e-5, 1e-5)

    print("KERNEL_OK")
</pallas_src>

<mosaic_0001>
module attributes {stable_mosaic.version = 11 : i64} {
  func.func @_critic_kernel_split_sa(%arg0: i32, %arg1: memref<8x24xf32, #tpu.memory_space<vmem>>, %arg2: memref<8x8xf32, #tpu.memory_space<vmem>>, %arg3: memref<24x64xbf16, #tpu.memory_space<vmem>>, %arg4: memref<8x64xbf16, #tpu.memory_space<vmem>>, %arg5: memref<1x64xf32, #tpu.memory_space<vmem>>, %arg6: memref<64x64xbf16, #tpu.memory_space<vmem>>, %arg7: memref<1x64xf32, #tpu.memory_space<vmem>>, %arg8: memref<64x64xbf16, #tpu.memory_space<vmem>>, %arg9: memref<1x64xf32, #tpu.memory_space<vmem>>, %arg10: memref<64x2xbf16, #tpu.memory_space<vmem>>, %arg11: memref<1x2xf32, #tpu.memory_space<vmem>>, %arg12: memref<8x2xf32, #tpu.memory_space<vmem>>) attributes {dimension_semantics = [#tpu.dimension_semantics<parallel>], iteration_bounds = array<i64: 1>, scalar_prefetch = 0 : i64, scratch_operands = 0 : i64, tpu.core_type = #tpu.core_type<tc>, window_params = [{transform_indices = @transform_0, window_bounds = array<i64: 8, 24>}, {transform_indices = @transform_1, window_bounds = array<i64: 8, 8>}, {pipeline_mode = #tpu.pipeline_mode<synchronous>, transform_indices = @transform_2, window_bounds = array<i64: 24, 64>}, {pipeline_mode = #tpu.pipeline_mode<synchronous>, transform_indices = @transform_3, window_bounds = array<i64: 8, 64>}, {pipeline_mode = #tpu.pipeline_mode<synchronous>, transform_indices = @transform_4, window_bounds = array<i64: 1, 64>}, {pipeline_mode = #tpu.pipeline_mode<synchronous>, transform_indices = @transform_5, window_bounds = array<i64: 64, 64>}, {pipeline_mode = #tpu.pipeline_mode<synchronous>, transform_indices = @transform_6, window_bounds = array<i64: 1, 64>}, {pipeline_mode = #tpu.pipeline_mode<synchronous>, transform_indices = @transform_7, window_bounds = array<i64: 64, 64>}, {pipeline_mode = #tpu.pipeline_mode<synchronous>, transform_indices = @transform_8, window_bounds = array<i64: 1, 64>}, {pipeline_mode = #tpu.pipeline_mode<synchronous>, transform_indices = @transform_9, window_bounds = array<i64: 64, 2>}, {pipeline_mode = #tpu.pipeline_mode<synchronous>, transform_indices = @transform_10, window_bounds = array<i64: 1, 2>}, {transform_indices = @transform_11, window_bounds = array<i64: 8, 2>}]} {
    %c0 = arith.constant 0 : index
    %c0_0 = arith.constant 0 : index
    %0 = vector.load %arg1[%c0, %c0_0] : memref<8x24xf32, #tpu.memory_space<vmem>>, vector<8x24xf32>
    %1 = arith.truncf %0 : vector<8x24xf32> to vector<8x24xbf16>
    %c0_1 = arith.constant 0 : index
    %c0_2 = arith.constant 0 : index
    %2 = vector.load %arg3[%c0_1, %c0_2] : memref<24x64xbf16, #tpu.memory_space<vmem>>, vector<24x64xbf16>
    %cst = arith.constant dense<0.000000e+00> : vector<8x64xf32>
    %3 = tpu.matmul %1, %2, %cst {dimension_numbers = #tpu.dot_dimension_numbers<[1], [0], [0], [1], [0, 0, 1, 1], [], []>} : vector<8x24xbf16>, vector<24x64xbf16>, vector<8x64xf32> -> vector<8x64xf32>
    %c0_3 = arith.constant 0 : index
    %c0_4 = arith.constant 0 : index
    %4 = vector.load %arg2[%c0_3, %c0_4] : memref<8x8xf32, #tpu.memory_space<vmem>>, vector<8x8xf32>
    %5 = arith.truncf %4 : vector<8x8xf32> to vector<8x8xbf16>
    %c0_5 = arith.constant 0 : index
    %c0_6 = arith.constant 0 : index
    %6 = vector.load %arg4[%c0_5, %c0_6] : memref<8x64xbf16, #tpu.memory_space<vmem>>, vector<8x64xbf16>
    %cst_7 = arith.constant dense<0.000000e+00> : vector<8x64xf32>
    %7 = tpu.matmul %5, %6, %cst_7 {dimension_numbers = #tpu.dot_dimension_numbers<[1], [0], [0], [1], [0, 0, 1, 1], [], []>} : vector<8x8xbf16>, vector<8x64xbf16>, vector<8x64xf32> -> vector<8x64xf32>
    %8 = arith.addf %3, %7 : vector<8x64xf32>
    %c0_8 = arith.constant 0 : index
    %c0_9 = arith.constant 0 : index
    %9 = vector.load %arg5[%c0_8, %c0_9] : memref<1x64xf32, #tpu.memory_space<vmem>>, vector<1x64xf32>
    %10 = vector.broadcast %9 : vector<1x64xf32> to vector<8x64xf32>
    %11 = arith.addf %8, %10 : vector<8x64xf32>
    %cst_10 = arith.constant 0.000000e+00 : f32
    %12 = vector.broadcast %cst_10 : f32 to vector<8x64xf32>
    %13 = arith.maximumf %11, %12 : vector<8x64xf32>
    %14 = arith.truncf %13 : vector<8x64xf32> to vector<8x64xbf16>
    %c0_11 = arith.constant 0 : index
    %c0_12 = arith.constant 0 : index
    %15 = vector.load %arg6[%c0_11, %c0_12] : memref<64x64xbf16, #tpu.memory_space<vmem>>, vector<64x64xbf16>
    %cst_13 = arith.constant dense<0.000000e+00> : vector<8x64xf32>
    %16 = tpu.matmul %14, %15, %cst_13 {dimension_numbers = #tpu.dot_dimension_numbers<[1], [0], [0], [1], [0, 0, 1, 1], [], []>} : vector<8x64xbf16>, vector<64x64xbf16>, vector<8x64xf32> -> vector<8x64xf32>
    %c0_14 = arith.constant 0 : index
    %c0_15 = arith.constant 0 : index
    %17 = vector.load %arg7[%c0_14, %c0_15] : memref<1x64xf32, #tpu.memory_space<vmem>>, vector<1x64xf32>
    %18 = vector.broadcast %17 : vector<1x64xf32> to vector<8x64xf32>
    %19 = arith.addf %16, %18 : vector<8x64xf32>
    %cst_16 = arith.constant 0.000000e+00 : f32
    %20 = vector.broadcast %cst_16 : f32 to vector<8x64xf32>
    %21 = arith.maximumf %19, %20 : vector<8x64xf32>
    %22 = arith.truncf %21 : vector<8x64xf32> to vector<8x64xbf16>
    %c0_17 = arith.constant 0 : index
    %c0_18 = arith.constant 0 : index
    %23 = vector.load %arg8[%c0_17, %c0_18] : memref<64x64xbf16, #tpu.memory_space<vmem>>, vector<64x64xbf16>
    %cst_19 = arith.constant dense<0.000000e+00> : vector<8x64xf32>
    %24 = tpu.matmul %22, %23, %cst_19 {dimension_numbers = #tpu.dot_dimension_numbers<[1], [0], [0], [1], [0, 0, 1, 1], [], []>} : vector<8x64xbf16>, vector<64x64xbf16>, vector<8x64xf32> -> vector<8x64xf32>
    %c0_20 = arith.constant 0 : index
    %c0_21 = arith.constant 0 : index
    %25 = vector.load %arg9[%c0_20, %c0_21] : memref<1x64xf32, #tpu.memory_space<vmem>>, vector<1x64xf32>
    %26 = vector.broadcast %25 : vector<1x64xf32> to vector<8x64xf32>
    %27 = arith.addf %24, %26 : vector<8x64xf32>
    %cst_22 = arith.constant 0.000000e+00 : f32
    %28 = vector.broadcast %cst_22 : f32 to vector<8x64xf32>
    %29 = arith.maximumf %27, %28 : vector<8x64xf32>
    %30 = arith.truncf %29 : vector<8x64xf32> to vector<8x64xbf16>
    %c0_23 = arith.constant 0 : index
    %c0_24 = arith.constant 0 : index
    %31 = vector.load %arg10[%c0_23, %c0_24] : memref<64x2xbf16, #tpu.memory_space<vmem>>, vector<64x2xbf16>
    %cst_25 = arith.constant dense<0.000000e+00> : vector<8x2xf32>
    %32 = tpu.matmul %30, %31, %cst_25 {dimension_numbers = #tpu.dot_dimension_numbers<[1], [0], [0], [1], [0, 0, 1, 1], [], []>} : vector<8x64xbf16>, vector<64x2xbf16>, vector<8x2xf32> -> vector<8x2xf32>
    %c0_26 = arith.constant 0 : index
    %c0_27 = arith.constant 0 : index
    %33 = vector.load %arg11[%c0_26, %c0_27] : memref<1x2xf32, #tpu.memory_space<vmem>>, vector<1x2xf32>
    %34 = vector.broadcast %33 : vector<1x2xf32> to vector<8x2xf32>
    %35 = arith.addf %32, %34 : vector<8x2xf32>
    %c0_28 = arith.constant 0 : index
    %c0_29 = arith.constant 0 : index
    %36 = vector.load %arg12[%c0_28, %c0_29] : memref<8x2xf32, #tpu.memory_space<vmem>>, vector<8x2xf32>
    tpu.vector_store %arg12[%c0_28, %c0_29], %35 {strides = array<i32>} : memref<8x2xf32, #tpu.memory_space<vmem>>, vector<8x2xf32>,
    return
  }
  func.func @transform_0(%arg0: i32) -> (i32, i32) {
    %c0_i32 = arith.constant 0 : i32
    %c0_i32_0 = arith.constant 0 : i32
    return %arg0, %c0_i32 : i32, i32
  }
  func.func @transform_1(%arg0: i32) -> (i32, i32) {
    %c0_i32 = arith.constant 0 : i32
    %c0_i32_0 = arith.constant 0 : i32
    return %arg0, %c0_i32 : i32, i32
  }
  func.func @transform_2(%arg0: i32) -> (i32, i32) {
    %c0_i32 = arith.constant 0 : i32
    %c0_i32_0 = arith.constant 0 : i32
    %c0_i32_1 = arith.constant 0 : i32
    return %c0_i32, %c0_i32_0 : i32, i32
  }
  func.func @transform_3(%arg0: i32) -> (i32, i32) {
    %c0_i32 = arith.constant 0 : i32
    %c0_i32_0 = arith.constant 0 : i32
    %c0_i32_1 = arith.constant 0 : i32
    return %c0_i32, %c0_i32_0 : i32, i32
  }
  func.func @transform_4(%arg0: i32) -> (i32, i32) {
    %c0_i32 = arith.constant 0 : i32
    %c0_i32_0 = arith.constant 0 : i32
    %c0_i32_1 = arith.constant 0 : i32
    return %c0_i32, %c0_i32_0 : i32, i32
  }
  func.func @transform_5(%arg0: i32) -> (i32, i32) {
    %c0_i32 = arith.constant 0 : i32
    %c0_i32_0 = arith.constant 0 : i32
    %c0_i32_1 = arith.constant 0 : i32
    return %c0_i32, %c0_i32_0 : i32, i32
  }
  func.func @transform_6(%arg0: i32) -> (i32, i32) {
    %c0_i32 = arith.constant 0 : i32
    %c0_i32_0 = arith.constant 0 : i32
    %c0_i32_1 = arith.constant 0 : i32
    return %c0_i32, %c0_i32_0 : i32, i32
  }
  func.func @transform_7(%arg0: i32) -> (i32, i32) {
    %c0_i32 = arith.constant 0 : i32
    %c0_i32_0 = arith.constant 0 : i32
    %c0_i32_1 = arith.constant 0 : i32
    return %c0_i32, %c0_i32_0 : i32, i32
  }
  func.func @transform_8(%arg0: i32) -> (i32, i32) {
    %c0_i32 = arith.constant 0 : i32
    %c0_i32_0 = arith.constant 0 : i32
    %c0_i32_1 = arith.constant 0 : i32
    return %c0_i32, %c0_i32_0 : i32, i32
  }
  func.func @transform_9(%arg0: i32) -> (i32, i32) {
    %c0_i32 = arith.constant 0 : i32
    %c0_i32_0 = arith.constant 0 : i32
    %c0_i32_1 = arith.constant 0 : i32
    return %c0_i32, %c0_i32_0 : i32, i32
  }
  func.func @transform_10(%arg0: i32) -> (i32, i32) {
    %c0_i32 = arith.constant 0 : i32
    %c0_i32_0 = arith.constant 0 : i32
    %c0_i32_1 = arith.constant 0 : i32
    return %c0_i32, %c0_i32_0 : i32, i32
  }
  func.func @transform_11(%arg0: i32) -> (i32, i32) {
    %c0_i32 = arith.constant 0 : i32
    %c0_i32_0 = arith.constant 0 : i32
    return %arg0, %c0_i32 : i32, i32
  }
}

</mosaic_0001>

<llo_original>
// kernel: tpu_custom_call.1
$region0: #{tpu_custom_call.1}
  #allocation0 [shape = 'u32[]', space=smem, size = 0x4, offset = 0x4, fixed_abs, tag = 'smem constant byte address 0x4 - core index']
  #allocation1 [shape = 'u32[72,128]{1,0:T(1,128)}', space=vmem, size = 0x9000, scoped, tag = 'internal scratch']
  %s0 = inlined_call_operand.hbm [shape: f32[8,24], index: 0, kind: input, shape index: {}]
  %s1 = inlined_call_operand.hbm [shape: f32[8,8], index: 1, kind: input, shape index: {}]
  %s2 = inlined_call_operand.hbm [shape: bf16[24,64], index: 2, kind: input, shape index: {}]
  %s3 = inlined_call_operand.hbm [shape: bf16[8,64], index: 3, kind: input, shape index: {}]
  %s4 = inlined_call_operand.vmem [shape: f32[1,64], index: 4, kind: input, shape index: {}]
  %s5 = inlined_call_operand.vmem [shape: bf16[64,64], index: 5, kind: input, shape index: {}]
  %s6 = inlined_call_operand.vmem [shape: f32[1,64], index: 6, kind: input, shape index: {}]
  %s7 = inlined_call_operand.hbm [shape: bf16[64,64], index: 7, kind: input, shape index: {}]
  %s8 = inlined_call_operand.vmem [shape: f32[1,64], index: 8, kind: input, shape index: {}]
  %s9 = inlined_call_operand.vmem [shape: bf16[64,2], index: 9, kind: input, shape index: {}]
  %s10 = inlined_call_operand.vmem [shape: f32[1,2], index: 10, kind: input, shape index: {}]
  %s11 = inlined_call_operand.vmem [shape: f32[8,2], index: 11, kind: output, shape index: {}]
  %s12 = sld [smem:[#allocation0]]
  $region74: #{tpu_custom_call.1} parent=0
    _
  %s14 = ssub.s32 1, %s12
  %s15 = scalar_select 0, %s14, %s12
  $region1: #{tpu_custom_call.1} parent=0
    #allocation2 [shape = 'u8[4096]{0}', space=vmem, size = 0x1000, scoped, tag = 'input window, operand 0, single buffered']
    #allocation3 [shape = 's32[1]{0}', space=sflag, size = 0x4, scoped, tag = 'scoped memory for tpu_custom_call.1']
    #allocation4 [shape = 'u8[4096]{0}', space=vmem, size = 0x1000, scoped, tag = 'input window, operand 1, single buffered']
    #allocation5 [shape = 's32[1]{0}', space=sflag, size = 0x4, scoped, tag = 'scoped memory for tpu_custom_call.1']
    #allocation6 [shape = 'u8[6144]{0}', space=vmem, size = 0x1800, scoped, tag = 'input window, operand 2, single buffered']
    #allocation7 [shape = 'u8[2048]{0}', space=vmem, size = 0x800, scoped, tag = 'input window, operand 3, single buffered']
    #allocation8 [shape = 's32[1]{0}', space=sflag, size = 0x4, scoped, tag = 'scoped memory for tpu_custom_call.1']
    #allocation9 [shape = 'u8[16384]{0}', space=vmem, size = 0x4000, scoped, tag = 'input window, operand 7, single buffered']
    %16 = vsyncpa [#allocation3], 0
    %17 = vsyncpa [#allocation5], 0
    %18 = vsyncpa [#allocation8], 0
    // Predicated region
    $region2: #{tpu_custom_call.1} parent=1 // pred_check
      _
    $region3: #{tpu_custom_call.1} parent=1 // pred_check_branch
      %20 = sbr.rel (0) target = $region5
    $region4: #{tpu_custom_call.1} parent=1 // pred_region
      %22 = vsyncadd [#allocation3], 0
      %s24 = sshll.u32 %s0, 4
      %s25 = int_to_ptr.hbm [resolvable:$true] %s24
      %s26 = sshll.u32 [#allocation2], 4
      %s27 = int_to_ptr.vmem [resolvable:$true] %s26
      %29 = dma.hbm_to_vmem [thread:$0]  %s25, 128, %s27, [#allocation3]
    $region5: #{tpu_custom_call.1} parent=1 // pred_fallthru
      _
    // Predicated region
    $region6: #{tpu_custom_call.1} parent=1 // pred_check
      _
    $region7: #{tpu_custom_call.1} parent=1 // pred_check_branch
      %31 = sbr.rel (0) target = $region9
    $region8: #{tpu_custom_call.1} parent=1 // pred_region
      %33 = vsyncadd [#allocation5], 0
      %s35 = sshll.u32 %s1, 4
      %s36 = int_to_ptr.hbm [resolvable:$true] %s35
      %s37 = sshll.u32 [#allocation4], 4
      %s38 = int_to_ptr.vmem [resolvable:$true] %s37
      %40 = dma.hbm_to_vmem [thread:$0]  %s36, 128, %s38, [#allocation5]
    $region9: #{tpu_custom_call.1} parent=1 // pred_fallthru
      _
    // Predicated region
    $region10: #{tpu_custom_call.1} parent=1 // pred_check
      _
    $region11: #{tpu_custom_call.1} parent=1 // pred_check_branch
      %42 = sbr.rel (0) target = $region13
    $region12: #{tpu_custom_call.1} parent=1 // pred_region
      %44 = vsyncadd [#allocation5], 0
      %s45 = sshll.u32 %s2, 4
      %s46 = int_to_ptr.hbm [resolvable:$true] %s45
      %s47 = sshll.u32 [#allocation6], 4
      %s48 = int_to_ptr.vmem [resolvable:$true] %s47
      %53 = dma.hbm_to_vmem [thread:$0]  %s46, 192, %s48, [#allocation5], 64, 64, 4
    $region13: #{tpu_custom_call.1} parent=1 // pred_fallthru
      _
    // Predicated region
    $region14: #{tpu_custom_call.1} parent=1 // pred_check
      _
    $region15: #{tpu_custom_call.1} parent=1 // pred_check_branch
      %55 = sbr.rel (0) target = $region17
    $region16: #{tpu_custom_call.1} parent=1 // pred_region
      %57 = vsyncadd [#allocation8], 0
      %s59 = sshll.u32 %s3, 4
      %s60 = int_to_ptr.hbm [resolvable:$true] %s59
      %s61 = sshll.u32 [#allocation7], 4
      %s62 = int_to_ptr.vmem [resolvable:$true] %s61
      %64 = dma.hbm_to_vmem [thread:$0]  %s60, 64, %s62, [#allocation8]
    $region17: #{tpu_custom_call.1} parent=1 // pred_fallthru
      _
    // Predicated region
    $region18: #{tpu_custom_call.1} parent=1 // pred_check
      _
    $region19: #{tpu_custom_call.1} parent=1 // pred_check_branch
      %66 = sbr.rel (0) target = $region21
    $region20: #{tpu_custom_call.1} parent=1 // pred_region
      _
    $region21: #{tpu_custom_call.1} parent=1 // pred_fallthru
      _
    // Predicated region
    $region22: #{tpu_custom_call.1} parent=1 // pred_check
      _
    $region23: #{tpu_custom_call.1} parent=1 // pred_check_branch
      %68 = sbr.rel (0) target = $region25
    $region24: #{tpu_custom_call.1} parent=1 // pred_region
      _
    $region25: #{tpu_custom_call.1} parent=1 // pred_fallthru
      _
    // Predicated region
    $region26: #{tpu_custom_call.1} parent=1 // pred_check
      _
    $region27: #{tpu_custom_call.1} parent=1 // pred_check_branch
      %70 = sbr.rel (0) target = $region29
    $region28: #{tpu_custom_call.1} parent=1 // pred_region
      _
    $region29: #{tpu_custom_call.1} parent=1 // pred_fallthru
      _
    // Predicated region
    $region30: #{tpu_custom_call.1} parent=1 // pred_check
      _
    $region31: #{tpu_custom_call.1} parent=1 // pred_check_branch
      %72 = sbr.rel (0) target = $region33
    $region32: #{tpu_custom_call.1} parent=1 // pred_region
      %74 = vsyncadd [#allocation8], 0
      %s75 = sshll.u32 %s7, 4
      %s76 = int_to_ptr.hbm [resolvable:$true] %s75
      %s77 = sshll.u32 [#allocation9], 4
      %s78 = int_to_ptr.vmem [resolvable:$true] %s77
      %83 = dma.hbm_to_vmem [thread:$0]  %s76, 512, %s78, [#allocation8], 64, 64, 4
    $region33: #{tpu_custom_call.1} parent=1 // pred_fallthru
      _
    // Predicated region
    $region34: #{tpu_custom_call.1} parent=1 // pred_check
      _
    $region35: #{tpu_custom_call.1} parent=1 // pred_check_branch
      %85 = sbr.rel (0) target = $region37
    $region36: #{tpu_custom_call.1} parent=1 // pred_region
      _
    $region37: #{tpu_custom_call.1} parent=1 // pred_fallthru
      _
    // Predicated region
    $region38: #{tpu_custom_call.1} parent=1 // pred_check
      _
    $region39: #{tpu_custom_call.1} parent=1 // pred_check_branch
      %87 = sbr.rel (0) target = $region41
    $region40: #{tpu_custom_call.1} parent=1 // pred_region
      _
    $region41: #{tpu_custom_call.1} parent=1 // pred_fallthru
      _
    // Predicated region
    $region42: #{tpu_custom_call.1} parent=1 // pred_check
      _
    $region43: #{tpu_custom_call.1} parent=1 // pred_check_branch
      %89 = sbr.rel (0) target = $region45
    $region44: #{tpu_custom_call.1} parent=1 // pred_region
      _
    $region45: #{tpu_custom_call.1} parent=1 // pred_fallthru
      _
    // Predicated region
    $region46: #{tpu_custom_call.1} parent=1 // pred_check
      _
    $region47: #{tpu_custom_call.1} parent=1 // pred_check_branch
      %91 = sbr.rel (0) target = $region49
    $region48: #{tpu_custom_call.1} parent=1 // pred_region
      %93 = dma.done [#allocation3], 128
    $region49: #{tpu_custom_call.1} parent=1 // pred_fallthru
      _
    // Predicated region
    $region50: #{tpu_custom_call.1} parent=1 // pred_check
      _
    $region51: #{tpu_custom_call.1} parent=1 // pred_check_branch
      %95 = sbr.rel (0) target = $region53
    $region52: #{tpu_custom_call.1} parent=1 // pred_region
      %97 = dma.done [#allocation5], 128
    $region53: #{tpu_custom_call.1} parent=1 // pred_fallthru
      _
    // Predicated region
    $region54: #{tpu_custom_call.1} parent=1 // pred_check
      _
    $region55: #{tpu_custom_call.1} parent=1 // pred_check_branch
      %99 = sbr.rel (0) target = $region57
    $region56: #{tpu_custom_call.1} parent=1 // pred_region
      %101 = dma.done [#allocation5], 192
    $region57: #{tpu_custom_call.1} parent=1 // pred_fallthru
      _
    // Predicated region
    $region58: #{tpu_custom_call.1} parent=1 // pred_check
      _
    $region59: #{tpu_custom_call.1} parent=1 // pred_check_branch
      %103 = sbr.rel (0) target = $region61
    $region60: #{tpu_custom_call.1} parent=1 // pred_region
      %105 = dma.done [#allocation8], 64
    $region61: #{tpu_custom_call.1} parent=1 // pred_fallthru
      _
    // Predicated region
    $region62: #{tpu_custom_call.1} parent=1 // pred_check
      _
    $region63: #{tpu_custom_call.1} parent=1 // pred_check_branch
      %107 = sbr.rel (0) target = $region65
    $region64: #{tpu_custom_call.1} parent=1 // pred_region
      %109 = dma.done [#allocation8], 512
    $region65: #{tpu_custom_call.1} parent=1 // pred_fallthru
      _
    %v111 = vld [vmem:[#allocation2] sm:$0xff]
    %v112 = vpack.c.bf16 %v111, %v111
    %v113 = vld [vmem:[#allocation6] sm:$0xf]
    %v114 = vld [vmem:[#allocation6 + $0x4] sm:$0xf]
    %v115 = vld [vmem:[#allocation6 + $0x8] sm:$0xf]
    %v116 = vld [vmem:[#allocation4] sm:$0xff]
    %v117 = vpack.c.bf16 %v116, %v116
    %v118 = vld [vmem:[#allocation7] sm:$0xf]
    %vm119 = vcmask 64512
    %v121 = vsel %vm119, %v117, 0
    %vm123 = vcmask 1043456
    %v125 = vsel %vm123, %v118, 0
    %127 = vmatpush.bf16.msra.mxu0 0
    %128 = vmatpush.bf16.msra.mxu0 0
    %129 = vmatpush.bf16.msra.mxu0 0
    %130 = vmatpush.bf16.msra.mxu0 0
    %131 = vmatpush.bf16.msra.mxu0 0
    %132 = vmatpush.bf16.msra.mxu0 0
    %133 = vmatpush.bf16.msra.mxu0 0
    %134 = vmatpush.bf16.msra.mxu0 %v125
    %135 = vmatmul.bf16.gmra.mxu0 %v121
    %v136 = vpop.f32.mrf.mxu0
    %v137 = vadd.f32 0.0, %v136
    %v138 = vpop.f32.mrf.mxu0
    %139 = vdwg.mxu0
    %v143 = vunpack.c.l.b16 %v113
    %v144 = vunpack.c.l.b16 %v114
    %v145 = vunpack.c.l.b16 %v115
    %v146 = vpack.c.b16 %v144, %v143
    %v147 = vpack.c.b16 %v145, %v145
    %vm149 = vcmask 195584
    %v151 = vsel %vm149, %v112, 0
    %v154 = vsel %vm123, %v147, 0
    %156 = vmatpush.bf16.msra.mxu0 0
    %157 = vmatpush.bf16.msra.mxu0 0
    %158 = vmatpush.bf16.msra.mxu0 0
    %159 = vmatpush.bf16.msra.mxu0 0
    %160 = vmatpush.bf16.msra.mxu0 0
    %161 = vmatpush.bf16.msra.mxu0 0
    %162 = vmatpush.bf16.msra.mxu0 %v154
    %163 = vmatpush.bf16.msra.mxu0 %v146
    %164 = vmatmul.bf16.gmra.mxu0 %v151
    %v165 = vpop.f32.mrf.mxu0
    %v166 = vadd.f32 %v137, %v165
    %v167 = vpop.f32.mrf.mxu0
    %168 = vdwg.mxu0
    %v169 = vld [vmem:[%s4] sm:$0x1]
    %v171 = vperm.slane %v169, 0
    %v173 = vadd.f32 %v166, %v171
    %v174 = vmax.f32 %v173, 0.0
    %v175 = vpack.c.bf16 %v174, %v174
    %v176 = vld [vmem:[%s5] sm:$0xf]
    %v177 = vld [vmem:[%s5 + $0x4] sm:$0xf]
    %v178 = vld [vmem:[%s5 + $0x8] sm:$0xf]
    %v179 = vld [vmem:[%s5 + $0xc] sm:$0xf]
    %v180 = vld [vmem:[%s5 + $0x10] sm:$0xf]
    %v181 = vld [vmem:[%s5 + $0x14] sm:$0xf]
    %v182 = vld [vmem:[%s5 + $0x18] sm:$0xf]
    %v183 = vld [vmem:[%s5 + $0x1c] sm:$0xf]
    %v184 = vld [vmem:[%s6] sm:$0x1]
    %v186 = vperm.slane %v184, 0
    %v196 = vunpack.c.l.b16 %v176
    %v197 = vunpack.c.l.b16 %v177
    %v198 = vunpack.c.l.b16 %v178
    %v199 = vunpack.c.l.b16 %v179
    %v200 = vunpack.c.l.b16 %v180
    %v201 = vunpack.c.l.b16 %v181
    %v202 = vunpack.c.l.b16 %v182
    %v203 = vunpack.c.l.b16 %v183
    %v204 = vpack.c.b16 %v197, %v196
    %v205 = vpack.c.b16 %v199, %v198
    %v206 = vpack.c.b16 %v201, %v200
    %v207 = vpack.c.b16 %v203, %v202
    %vm212 = vcmask 523264
    %v214 = vsel %vm212, %v175, 0
    %216 = vmatpush.bf16.msra.mxu0 0
    %217 = vmatpush.bf16.msra.mxu0 0
    %218 = vmatpush.bf16.msra.mxu0 0
    %219 = vmatpush.bf16.msra.mxu0 0
    %220 = vmatpush.bf16.msra.mxu0 %v207
    %221 = vmatpush.bf16.msra.mxu0 %v206
    %222 = vmatpush.bf16.msra.mxu0 %v205
    %223 = vmatpush.bf16.msra.mxu0 %v204
    %224 = vmatmul.bf16.gmra.mxu0 %v214
    %v225 = vpop.f32.mrf.mxu0
    %v226 = vadd.f32 %v186, %v225
    %v227 = vpop.f32.mrf.mxu0
    %228 = vdwg.mxu0
    %v229 = vmax.f32 %v226, 0.0
    %v230 = vpack.c.bf16 %v229, %v229
    %v231 = vld [vmem:[#allocation9] sm:$0xf]
    %v232 = vld [vmem:[#allocation9 + $0x4] sm:$0xf]
    %v233 = vld [vmem:[#allocation9 + $0x8] sm:$0xf]
    %v234 = vld [vmem:[#allocation9 + $0xc] sm:$0xf]
    %v235 = vld [vmem:[#allocation9 + $0x10] sm:$0xf]
    %v236 = vld [vmem:[#allocation9 + $0x14] sm:$0xf]
    %v237 = vld [vmem:[#allocation9 + $0x18] sm:$0xf]
    %v238 = vld [vmem:[#allocation9 + $0x1c] sm:$0xf]
    %v239 = vld [vmem:[%s8] sm:$0x1]
    %v241 = vperm.slane %v239, 0
    %v251 = vunpack.c.l.b16 %v231
    %v252 = vunpack.c.l.b16 %v232
    %v253 = vunpack.c.l.b16 %v233
    %v254 = vunpack.c.l.b16 %v234
    %v255 = vunpack.c.l.b16 %v235
    %v256 = vunpack.c.l.b16 %v236
    %v257 = vunpack.c.l.b16 %v237
    %v258 = vunpack.c.l.b16 %v238
    %v259 = vpack.c.b16 %v252, %v251
    %v260 = vpack.c.b16 %v254, %v253
    %v261 = vpack.c.b16 %v256, %v255
    %v262 = vpack.c.b16 %v258, %v257
    %v268 = vsel %vm212, %v230, 0
    %270 = vmatpush.bf16.msra.mxu0 0
    %271 = vmatpush.bf16.msra.mxu0 0
    %272 = vmatpush.bf16.msra.mxu0 0
    %273 = vmatpush.bf16.msra.mxu0 0
    %274 = vmatpush.bf16.msra.mxu0 %v262
    %275 = vmatpush.bf16.msra.mxu0 %v261
    %276 = vmatpush.bf16.msra.mxu0 %v260
    %277 = vmatpush.bf16.msra.mxu0 %v259
    %278 = vmatmul.bf16.gmra.mxu0 %v268
    %v279 = vpop.f32.mrf.mxu0
    %v280 = vadd.f32 %v241, %v279
    %v281 = vpop.f32.mrf.mxu0
    %282 = vdwg.mxu0
    %v283 = vmax.f32 %v280, 0.0
    %v284 = vpack.c.bf16 %v283, %v283
    %v285 = vld [vmem:[%s9] sm:$0xf]
    %v286 = vld [vmem:[%s9 + $0x4] sm:$0xf]
    %v287 = vld [vmem:[%s9 + $0x8] sm:$0xf]
    %v288 = vld [vmem:[%s9 + $0xc] sm:$0xf]
    %v289 = vld [vmem:[%s9 + $0x10] sm:$0xf]
    %v290 = vld [vmem:[%s9 + $0x14] sm:$0xf]
    %v291 = vld [vmem:[%s9 + $0x18] sm:$0xf]
    %v292 = vld [vmem:[%s9 + $0x1c] sm:$0xf]
    %v293 = vld [vmem:[%s10] sm:$0x1]
    %v295 = vperm.slane %v293, 0
    %v305 = vunpack.c.l.b16 %v285
    %v306 = vunpack.c.l.b16 %v286
    %v307 = vunpack.c.l.b16 %v287
    %v308 = vunpack.c.l.b16 %v288
    %v309 = vunpack.c.l.b16 %v289
    %v310 = vunpack.c.l.b16 %v290
    %v311 = vunpack.c.l.b16 %v291
    %v312 = vunpack.c.l.b16 %v292
    %v313 = vpack.c.b16 %v306, %v305
    %v314 = vpack.c.b16 %v308, %v307
    %v315 = vpack.c.b16 %v310, %v309
    %v316 = vpack.c.b16 %v312, %v311
    %v322 = vsel %vm212, %v284, 0
    %324 = vmatpush.bf16.msra.mxu0 0
    %325 = vmatpush.bf16.msra.mxu0 0
    %326 = vmatpush.bf16.msra.mxu0 0
    %327 = vmatpush.bf16.msra.mxu0 0
    %328 = vmatpush.bf16.msra.mxu0 %v316
    %329 = vmatpush.bf16.msra.mxu0 %v315
    %330 = vmatpush.bf16.msra.mxu0 %v314
    %331 = vmatpush.bf16.msra.mxu0 %v313
    %332 = vmatmul.bf16.gmra.mxu0 %v322
    %v333 = vpop.f32.mrf.mxu0
    %v334 = vadd.f32 %v295, %v333
    %v335 = vpop.f32.mrf.mxu0
    %336 = vdwg.mxu0
    %vm337 = vcmask 15360
    %338 = vst.msk [vmem:[%s11] sm:$0xff] %vm337, %v334
    // Predicated region
    $region66: #{tpu_custom_call.1} parent=1 // pred_check
      _
    $region67: #{tpu_custom_call.1} parent=1 // pred_check_branch
      %340 = sbr.rel (0) target = $region69
    $region68: #{tpu_custom_call.1} parent=1 // pred_region
      _
    $region69: #{tpu_custom_call.1} parent=1 // pred_fallthru
      _
    // Predicated region
    $region70: #{tpu_custom_call.1} parent=1 // pred_check
      _
    $region71: #{tpu_custom_call.1} parent=1 // pred_check_branch
      %342 = sbr.rel (0) target = $region73
    $region72: #{tpu_custom_call.1} parent=1 // pred_region
      _
    $region73: #{tpu_custom_call.1} parent=1 // pred_fallthru
      _
    %343 = vsyncpa [#allocation3], 1
    %344 = vsyncpa [#allocation5], 1
    %345 = vsyncpa [#allocation8], 1

</llo_original>
